<compile_context>
chip_gen: v6e
topology: v6e:2x2x1
jax: 0.10.0
libtpu: 0.0.40
codegen_flags: <defaults>
</compile_context>

<pallas_src>
import functools

import jax
import jax.numpy as jnp
import numpy as np
from jax.experimental import pallas as pl
from jax.experimental.pallas import tpu as pltpu

EPS = 1e-5
_VMEM_LIMIT_BYTES = 32 * 1024 * 1024   # explicit scoped-VMEM limit (all gens)
_TILE_BUDGET_BYTES = 24 * 1024 * 1024  # budget for resident VMEM tiles


def _pick_tile_rows(rows: int, lanes: int, itemsize: int, bufs_per_row: int) -> int:
    """Largest row tile (multiple of 8, or the full row dim) fitting budget.

    bufs_per_row counts tile-sized VMEM buffers alive at once (double-buffered
    inputs/outputs + elementwise temps).
    """
    lanes_padded = ((lanes + 127) // 128) * 128
    per_row = bufs_per_row * lanes_padded * max(itemsize, 4)
    max_rows = max(8, _TILE_BUDGET_BYTES // per_row)
    max_rows = min(max_rows, 4096)
    if rows <= max_rows:
        return rows                      # full second-to-last dim -> always legal
    return (max_rows // 8) * 8


def _stats_kernel(x_ref, sum_ref, sq_ref, *, rows_total, tile_rows, mask_rows):
    """Accumulate per-column sum and sum-of-squares across row tiles."""
    i = pl.program_id(0)

    @pl.when(i == 0)
    def _init():
        sum_ref[...] = jnp.zeros_like(sum_ref)
        sq_ref[...] = jnp.zeros_like(sq_ref)

    x = x_ref[...].astype(jnp.float32)
    if mask_rows:  # only traced when rows_total % tile_rows != 0
        row_ids = i * tile_rows + jax.lax.broadcasted_iota(jnp.int32, x.shape, 0)
        x = jnp.where(row_ids < rows_total, x, 0.0)
    sum_ref[...] += jnp.sum(x, axis=0, keepdims=True)
    sq_ref[...] += jnp.sum(x * x, axis=0, keepdims=True)


def _normalize_kernel(x_ref, ss_ref, o_ref):
    """y = x * scale[col] + shift[col]  (folded per-channel batchnorm affine)."""
    scale = ss_ref[0:1, :]
    shift = ss_ref[1:2, :]
    x = x_ref[...].astype(jnp.float32)
    o_ref[...] = (x * scale + shift).astype(o_ref.dtype)


def spectrogram_norm(inputs, gamma, beta):
    """inputs: (T, N, bands, C, freq).  gamma/beta: (bands*C,)."""
    T, N, bands, C, freq = inputs.shape
    channels = bands * C
    assert gamma.shape == (channels,) and beta.shape == (channels,)

    rows = T * N
    lanes = channels * freq
    # Free row-major reshape (adjacent-dim collapse: no transpose, no HBM pass).
    x2 = inputs.reshape(rows, lanes)
    itemsize = inputs.dtype.itemsize

    # ---- pass 1: per-column sum / sum-of-squares ---------------------------
    # Only the input stream is double-buffered (+1 tile-sized temp for x*x /
    # masking); outputs are resident (1, lanes).
    tile_stats = _pick_tile_rows(rows, lanes, itemsize, bufs_per_row=3)
    n_stats = pl.cdiv(rows, tile_stats)
    mask_rows = (rows % tile_stats) != 0

    col_sum, col_sq = pl.pallas_call(
        functools.partial(
            _stats_kernel,
            rows_total=rows, tile_rows=tile_stats, mask_rows=mask_rows),
        out_shape=(
            jax.ShapeDtypeStruct((1, lanes), jnp.float32),
            jax.ShapeDtypeStruct((1, lanes), jnp.float32),
        ),
        grid_spec=pltpu.PrefetchScalarGridSpec(
            num_scalar_prefetch=0,
            grid=(n_stats,),
            in_specs=[pl.BlockSpec((tile_stats, lanes), lambda i: (i, 0))],
            out_specs=(
                pl.BlockSpec((1, lanes), lambda i: (0, 0)),
                pl.BlockSpec((1, lanes), lambda i: (0, 0)),
            ),
        ),
        compiler_params=pltpu.CompilerParams(
            dimension_semantics=("arbitrary",),   # reduction axis
            vmem_limit_bytes=_VMEM_LIMIT_BYTES,
        ),
    )(x2)

    # ---- tiny finalize in plain JAX (a few KB of data) ----------------------
    count = float(rows * freq)  # elements per channel = N * freq * T
    sum_c = jnp.sum(col_sum.reshape(channels, freq), axis=1)
    sq_c = jnp.sum(col_sq.reshape(channels, freq), axis=1)
    mean = sum_c / count
    var = jnp.maximum(sq_c / count - mean * mean, 0.0)  # biased var, clamped
    inv_std = jax.lax.rsqrt(var + EPS)
    scale = gamma.astype(jnp.float32) * inv_std
    shift = beta.astype(jnp.float32) - mean * scale
    # Packed (2, lanes) slab: row 0 = per-column scale, row 1 = per-column shift.
    scale_shift = jnp.stack(
        [jnp.repeat(scale, freq), jnp.repeat(shift, freq)], axis=0)

    # ---- pass 2: elementwise normalize (lane-dense FMA) ---------------------
    tile_norm = _pick_tile_rows(rows, lanes, itemsize, bufs_per_row=4)
    n_norm = pl.cdiv(rows, tile_norm)

    out2 = pl.pallas_call(
        _normalize_kernel,
        out_shape=jax.ShapeDtypeStruct((rows, lanes), inputs.dtype),
        grid_spec=pltpu.PrefetchScalarGridSpec(
            num_scalar_prefetch=0,
            grid=(n_norm,),
            in_specs=[
                pl.BlockSpec((tile_norm, lanes), lambda i: (i, 0)),
                pl.BlockSpec((2, lanes), lambda i: (0, 0)),
            ],
            out_specs=pl.BlockSpec((tile_norm, lanes), lambda i: (i, 0)),
        ),
        compiler_params=pltpu.CompilerParams(
            dimension_semantics=("parallel",),    # megacore sharding on v7x
            vmem_limit_bytes=_VMEM_LIMIT_BYTES,
        ),
    )(x2, scale_shift)

    # Free reshape back to the module's output layout.
    return out2.reshape(T, N, bands, C, freq)


def _reference(inputs, gamma, beta):
    """Pure-JAX reference of the PyTorch module (training-mode BatchNorm2d)."""
    T, N, bands, C, freq = inputs.shape
    x = jnp.transpose(inputs, (2, 3, 0, 1, 4)).reshape(bands * C, -1)
    mean = jnp.mean(x, axis=1, keepdims=True)
    var = jnp.mean((x - mean) ** 2, axis=1, keepdims=True)
    y = (x - mean) / jnp.sqrt(var + EPS)
    y = y * gamma[:, None] + beta[:, None]
    y = y.reshape(bands, C, T, N, freq)
    return jnp.transpose(y, (2, 3, 0, 1, 4))


if __name__ == "__main__":
    # Small shapes consistent with the module: T=8, N=2, bands=2, C=4, freq=16.
    T, N, bands, C, freq = 8, 2, 2, 4, 16
    channels = bands * C

    key = jax.random.PRNGKey(0)
    k_x, k_g, k_b = jax.random.split(key, 3)
    x = jax.random.normal(k_x, (T, N, bands, C, freq), dtype=jnp.float32)
    # Nontrivial deterministic affine parameters to exercise the affine path.
    gamma = 1.0 + 0.1 * jax.random.normal(k_g, (channels,), dtype=jnp.float32)
    beta = 0.1 * jax.random.normal(k_b, (channels,), dtype=jnp.float32)

    out = spectrogram_norm(x, gamma, beta)
    out = jax.block_until_ready(out)

    ref = _reference(x, gamma, beta)
    np.testing.assert_allclose(np.asarray(out), np.asarray(ref), rtol=1e-5, atol=1e-5)

    print("KERNEL_OK")
</pallas_src>

<mosaic_0001>
module attributes {stable_mosaic.version = 11 : i64} {
  func.func @_stats_kernel(%arg0: i32, %arg1: memref<16x128xf32, #tpu.memory_space<vmem>>, %arg2: memref<1x128xf32, #tpu.memory_space<vmem>>, %arg3: memref<1x128xf32, #tpu.memory_space<vmem>>) attributes {dimension_semantics = [#tpu.dimension_semantics<arbitrary>], iteration_bounds = array<i64: 1>, scalar_prefetch = 0 : i64, scratch_operands = 0 : i64, tpu.core_type = #tpu.core_type<tc>, window_params = [{transform_indices = @transform_0, window_bounds = array<i64: 16, 128>}, {pipeline_mode = #tpu.pipeline_mode<synchronous>, transform_indices = @transform_1, window_bounds = array<i64: 1, 128>}, {pipeline_mode = #tpu.pipeline_mode<synchronous>, transform_indices = @transform_2, window_bounds = array<i64: 1, 128>}]} {
    %c0_i32 = arith.constant 0 : i32
    %0 = arith.cmpi eq, %arg0, %c0_i32 : i32
    %1 = arith.extui %0 : i1 to i32
    %c0_i32_0 = arith.constant 0 : i32
    %2 = arith.cmpi ne, %1, %c0_i32_0 : i32
    scf.if %2 {
      %cst_11 = arith.constant 0.000000e+00 : f32
      %15 = vector.broadcast %cst_11 : f32 to vector<1x128xf32>
      %c0_12 = arith.constant 0 : index
      %c0_13 = arith.constant 0 : index
      %16 = vector.load %arg2[%c0_12, %c0_13] : memref<1x128xf32, #tpu.memory_space<vmem>>, vector<1x128xf32>
      tpu.vector_store %arg2[%c0_12, %c0_13], %15 {strides = array<i32>} : memref<1x128xf32, #tpu.memory_space<vmem>>, vector<1x128xf32>,
      %cst_14 = arith.constant 0.000000e+00 : f32
      %17 = vector.broadcast %cst_14 : f32 to vector<1x128xf32>
      %c0_15 = arith.constant 0 : index
      %c0_16 = arith.constant 0 : index
      %18 = vector.load %arg3[%c0_15, %c0_16] : memref<1x128xf32, #tpu.memory_space<vmem>>, vector<1x128xf32>
      tpu.vector_store %arg3[%c0_15, %c0_16], %17 {strides = array<i32>} : memref<1x128xf32, #tpu.memory_space<vmem>>, vector<1x128xf32>,
    } else {
    }
    %c0 = arith.constant 0 : index
    %c0_1 = arith.constant 0 : index
    %3 = vector.load %arg1[%c0, %c0_1] : memref<16x128xf32, #tpu.memory_space<vmem>>, vector<16x128xf32>
    %c0_2 = arith.constant 0 : index
    %c0_3 = arith.constant 0 : index
    %4 = vector.load %arg2[%c0_2, %c0_3] : memref<1x128xf32, #tpu.memory_space<vmem>>, vector<1x128xf32>
    %cst = arith.constant dense<0.000000e+00> : vector<128xf32>
    %5 = vector.multi_reduction <add>, %3, %cst [0] : vector<16x128xf32> to vector<128xf32>
    %6 = vector.shape_cast %5 : vector<128xf32> to vector<1x128xf32>
    %7 = arith.addf %4, %6 : vector<1x128xf32>
    %c0_4 = arith.constant 0 : index
    %c0_5 = arith.constant 0 : index
    %8 = vector.load %arg2[%c0_4, %c0_5] : memref<1x128xf32, #tpu.memory_space<vmem>>, vector<1x128xf32>
    tpu.vector_store %arg2[%c0_4, %c0_5], %7 {strides = array<i32>} : memref<1x128xf32, #tpu.memory_space<vmem>>, vector<1x128xf32>,
    %c0_6 = arith.constant 0 : index
    %c0_7 = arith.constant 0 : index
    %9 = vector.load %arg3[%c0_6, %c0_7] : memref<1x128xf32, #tpu.memory_space<vmem>>, vector<1x128xf32>
    %10 = arith.mulf %3, %3 : vector<16x128xf32>
    %cst_8 = arith.constant dense<0.000000e+00> : vector<128xf32>
    %11 = vector.multi_reduction <add>, %10, %cst_8 [0] : vector<16x128xf32> to vector<128xf32>
    %12 = vector.shape_cast %11 : vector<128xf32> to vector<1x128xf32>
    %13 = arith.addf %9, %12 : vector<1x128xf32>
    %c0_9 = arith.constant 0 : index
    %c0_10 = arith.constant 0 : index
    %14 = vector.load %arg3[%c0_9, %c0_10] : memref<1x128xf32, #tpu.memory_space<vmem>>, vector<1x128xf32>
    tpu.vector_store %arg3[%c0_9, %c0_10], %13 {strides = array<i32>} : memref<1x128xf32, #tpu.memory_space<vmem>>, vector<1x128xf32>,
    return
  }
  func.func @transform_0(%arg0: i32) -> (i32, i32) {
    %c0_i32 = arith.constant 0 : i32
    %c0_i32_0 = arith.constant 0 : i32
    return %arg0, %c0_i32 : i32, i32
  }
  func.func @transform_1(%arg0: i32) -> (i32, i32) {
    %c0_i32 = arith.constant 0 : i32
    %c0_i32_0 = arith.constant 0 : i32
    %c0_i32_1 = arith.constant 0 : i32
    return %c0_i32, %c0_i32_0 : i32, i32
  }
  func.func @transform_2(%arg0: i32) -> (i32, i32) {
    %c0_i32 = arith.constant 0 : i32
    %c0_i32_0 = arith.constant 0 : i32
    %c0_i32_1 = arith.constant 0 : i32
    return %c0_i32, %c0_i32_0 : i32, i32
  }
}

</mosaic_0001>

<llo_original>
// kernel: tpu_custom_call.1
$region0: #{tpu_custom_call.1}
  #allocation0 [shape = 'u32[]', space=smem, size = 0x4, offset = 0x4, fixed_abs, tag = 'smem constant byte address 0x4 - core index']
  #allocation1 [shape = 'u32[144,128]{1,0:T(1,128)}', space=vmem, size = 0x12000, scoped, tag = 'internal scratch']
  %s0 = inlined_call_operand.hbm [shape: f32[16,128], index: 0, kind: input, shape index: {}]
  %s1 = inlined_call_operand.hbm [shape: f32[1,128], index: 1, kind: output, shape index: {0}]
  %s2 = inlined_call_operand.hbm [shape: f32[1,128], index: 2, kind: output, shape index: {1}]
  %3 = xla_tuple %s1, %s2
  %s4 = sld [smem:[#allocation0]]
  $region30: #{tpu_custom_call.1} parent=0
    _
  %s6 = ssub.s32 1, %s4
  %s7 = scalar_select 0, %s6, %s4
  $region1: #{tpu_custom_call.1} parent=0
    #allocation2 [shape = 'u8[8192]{0}', space=vmem, size = 0x2000, scoped, tag = 'input window, operand 0, single buffered']
    #allocation3 [shape = 's32[1]{0}', space=sflag, size = 0x4, scoped, tag = 'scoped memory for tpu_custom_call.1']
    #allocation4 [shape = 's32[1]{0}', space=sflag, size = 0x4, scoped, tag = 'scoped memory for tpu_custom_call.1']
    #allocation5 [shape = 'u8[512]{0}', space=vmem, size = 0x400, scoped, tag = 'output window, operand 0, single buffered']
    #allocation6 [shape = 'u8[512]{0}', space=vmem, size = 0x400, scoped, tag = 'output window, operand 1, single buffered']
    #allocation7 [shape = 's32[1]{0}', space=sflag, size = 0x4, scoped, tag = 'scoped memory for tpu_custom_call.1']
    %8 = vsyncpa [#allocation3], 0
    %9 = vsyncpa [#allocation4], 0
    %10 = vsyncpa [#allocation7], 0
    // Predicated region
    $region2: #{tpu_custom_call.1} parent=1 // pred_check
      _
    $region3: #{tpu_custom_call.1} parent=1 // pred_check_branch
      %12 = sbr.rel (0) target = $region5
    $region4: #{tpu_custom_call.1} parent=1 // pred_region
      %s14 = ssub.s32 256, 256
      %15 = vsyncadd [#allocation3], %s14
      %s16 = sshll.u32 [#allocation2], 4
      %s17 = int_to_ptr.vmem [resolvable:$true] %s16
      %22 = dma.hbm_to_vmem [thread:$0]  %s0, 256, %s17, [#allocation3], 128, 128, 8
    $region5: #{tpu_custom_call.1} parent=1 // pred_fallthru
      _
    // Predicated region
    $region6: #{tpu_custom_call.1} parent=1 // pred_check
      _
    $region7: #{tpu_custom_call.1} parent=1 // pred_check_branch
      %24 = sbr.rel (0) target = $region9
    $region8: #{tpu_custom_call.1} parent=1 // pred_region
      %25 = dma.done [#allocation3], 256
    $region9: #{tpu_custom_call.1} parent=1 // pred_fallthru
      _
    %p26 = scmp.eq.s32.totalorder 0, 0
    // Predicated region
    $region10: #{tpu_custom_call.1} parent=1 // pred_check
      %p27 = pneg %p26
    $region11: #{tpu_custom_call.1} parent=1 // pred_check_branch
      %29 = sbr.rel (%p27) target = $region13
    $region12: #{tpu_custom_call.1} parent=1 // pred_region
      %30 = vst [vmem:[#allocation5] sm:$0x1] 0.0
      %31 = vst [vmem:[#allocation6] sm:$0x1] 0.0
    $region13: #{tpu_custom_call.1} parent=1 // pred_fallthru
      _
    %v32 = vld [vmem:[#allocation2] sm:$0xff]
    %v33 = vld [vmem:[#allocation2 + $0x8] sm:$0xff]
    %v34 = vld [vmem:[#allocation5] sm:$0x1]
    %v35 = vadd.f32 %v32, %v33
    %v36 = vrot.slane %v35, 4
    %v37 = vadd.f32 %v35, %v36
    %v38 = vrot.slane %v37, 2
    %v39 = vadd.f32 %v37, %v38
    %v40 = vrot.slane %v39, 1
    %v41 = vadd.f32 %v39, %v40
    %v42 = vadd.f32 %v34, %v41
    %43 = vst [vmem:[#allocation5] sm:$0x1] %v42
    %v44 = vld [vmem:[#allocation6] sm:$0x1]
    %v45 = vmul.f32 %v32, %v32
    %v46 = vmul.f32 %v33, %v33
    %v47 = vadd.f32 %v45, %v46
    %v48 = vrot.slane %v47, 4
    %v49 = vadd.f32 %v47, %v48
    %v50 = vrot.slane %v49, 2
    %v51 = vadd.f32 %v49, %v50
    %v52 = vrot.slane %v51, 1
    %v53 = vadd.f32 %v51, %v52
    %v54 = vadd.f32 %v44, %v53
    %55 = vst [vmem:[#allocation6] sm:$0x1] %v54
    // Predicated region
    $region14: #{tpu_custom_call.1} parent=1 // pred_check
      _
    $region15: #{tpu_custom_call.1} parent=1 // pred_check_branch
      %57 = sbr.rel (0) target = $region17
    $region16: #{tpu_custom_call.1} parent=1 // pred_region
      %s59 = ssub.s32 16, 16
      %60 = vsyncadd [#allocation4], %s59
      %s62 = sshll.u32 [#allocation5], 4
      %s63 = int_to_ptr.vmem [resolvable:$true] %s62
      %65 = dma.vmem_to_hbm [thread:$0]  %s63, 16, %s1, [#allocation4]
    $region17: #{tpu_custom_call.1} parent=1 // pred_fallthru
      _
    // Predicated region
    $region18: #{tpu_custom_call.1} parent=1 // pred_check
      _
    $region19: #{tpu_custom_call.1} parent=1 // pred_check_branch
      %67 = sbr.rel (0) target = $region21
    $region20: #{tpu_custom_call.1} parent=1 // pred_region
      %s69 = ssub.s32 16, 16
      %70 = vsyncadd [#allocation7], %s69
      %s72 = sshll.u32 [#allocation6], 4
      %s73 = int_to_ptr.vmem [resolvable:$true] %s72
      %75 = dma.vmem_to_hbm [thread:$0]  %s73, 16, %s2, [#allocation7]
    $region21: #{tpu_custom_call.1} parent=1 // pred_fallthru
      _
    // Predicated region
    $region22: #{tpu_custom_call.1} parent=1 // pred_check
      _
    $region23: #{tpu_custom_call.1} parent=1 // pred_check_branch
      %77 = sbr.rel (0) target = $region25
    $region24: #{tpu_custom_call.1} parent=1 // pred_region
      %78 = dma.done [#allocation4], 16
    $region25: #{tpu_custom_call.1} parent=1 // pred_fallthru
      _
    // Predicated region
    $region26: #{tpu_custom_call.1} parent=1 // pred_check
      _
    $region27: #{tpu_custom_call.1} parent=1 // pred_check_branch
      %80 = sbr.rel (0) target = $region29
    $region28: #{tpu_custom_call.1} parent=1 // pred_region
      %81 = dma.done [#allocation7], 16
    $region29: #{tpu_custom_call.1} parent=1 // pred_fallthru
      _
    %82 = vsyncpa [#allocation3], 1
    %83 = vsyncpa [#allocation4], 1
    %84 = vsyncpa [#allocation7], 1

</llo_original>
